<compile_context>
chip_gen: v7x
topology: tpu7x:2x2x1
jax: 0.10.0
libtpu: 0.0.40
codegen_flags: <defaults>
</compile_context>

<pallas_src>
import functools

import jax
import jax.numpy as jnp
from jax import lax
from jax.experimental import pallas as pl
from jax.experimental.pallas import tpu as pltpu

_NT = (((1,), (1,)), ((), ()))  # contract last dim of both operands ("A @ B.T")


# --------------------------------------------------------------------------- #
# Kernel 1: ordered p*k fast path — batch is [id0]*K, [id1]*K, ... (distinct ids)
# --------------------------------------------------------------------------- #
def _ordered_cluster_kernel(margin, p, k, feat_ref, loss_ref, intra_ref, inter_ref):
    feats = feat_ref[...]                                   # (B, D) f32
    b, d = feats.shape
    feats_r = feats.reshape(p, k, d)                        # (P, K, D) sublane split

    # per-class centers: mean over the K member rows (VPU/XLU, no MXU padding)
    centers = jnp.sum(feats_r, axis=1) * jnp.float32(1.0 / k)   # (P, D)

    # ---- intra-class: max ||x - c_i|| over the K members of class i ---------
    diff = feats_r - centers[:, None, :]                    # (P, K, D)
    d2_intra = jnp.sum(diff * diff, axis=2)                 # (P, K) lane reduce
    intra_col = jnp.sqrt(
        jnp.maximum(jnp.max(d2_intra, axis=1, keepdims=True), 1e-12))  # (P, 1)
    intra_row = intra_col.T                                 # (1, P) tiny relayout

    # ---- inter-class: min ||c_i - c_j||, j != i ------------------------------
    gram = lax.dot_general(centers, centers, dimension_numbers=_NT,
                           preferred_element_type=jnp.float32)        # (P, P)
    cc_col = jnp.sum(centers * centers, axis=1, keepdims=True)        # (P, 1)
    d2_inter = cc_col + cc_col.T - 2.0 * gram                         # (P, P)
    row = lax.broadcasted_iota(jnp.int32, (p, p), 0)
    col = lax.broadcasted_iota(jnp.int32, (p, p), 1)
    d2_inter = jnp.where(row == col, jnp.inf, d2_inter)
    # symmetric matrix -> axis-0 min gives a lane-dense (1, P) row directly
    inter_row = jnp.sqrt(
        jnp.maximum(jnp.min(d2_inter, axis=0, keepdims=True), 1e-12))  # (1, P)

    hinge = jnp.maximum(intra_row - inter_row + jnp.float32(margin), 0.0)  # (1, P)
    loss_ref[...] = jnp.sum(hinge, axis=1, keepdims=True) * jnp.float32(1.0 / p)
    intra_ref[...] = intra_row
    inter_ref[...] = inter_row


# --------------------------------------------------------------------------- #
# Kernel 2: general (unordered) fallback — membership mask + MXU matmuls
# --------------------------------------------------------------------------- #
def _masked_cluster_kernel(margin, feat_ref, tgt_ref, uniq_ref,
                           loss_ref, intra_ref, inter_ref):
    feats = feat_ref[...]                                   # (B, D) f32
    tgt = tgt_ref[...]                                      # (1, B) i32
    uniq = uniq_ref[...]                                    # (P, 1) i32
    p = uniq.shape[0]

    mask_bool = (uniq == tgt)                               # (P, B) bool
    mask = mask_bool.astype(jnp.float32)                    # (P, B)
    counts = jnp.sum(mask, axis=1, keepdims=True)           # (P, 1), >= 1 by construction
    # fold 1/counts into the mask: (P,1) reciprocal + (P,B) mul instead of a (P,D) divide
    mask_scaled = mask * pl.reciprocal(counts)              # exact recip (keeps 1e-4 check)

    # per-class centers (NN matmul, no transpose needed)
    centers = jnp.dot(mask_scaled, feats,
                      preferred_element_type=jnp.float32)   # (P, D)

    xx_row = jnp.sum(feats * feats, axis=1, keepdims=True).T      # (1, B) small relayout
    cc_col = jnp.sum(centers * centers, axis=1, keepdims=True)    # (P, 1)

    # ---- intra-class: max distance center_i -> member features --------------
    cx = lax.dot_general(centers, feats, dimension_numbers=_NT,
                         preferred_element_type=jnp.float32)      # (P, B), no feats.T
    d2_intra = cc_col + xx_row - 2.0 * cx                         # (P, B)
    d2_intra = jnp.where(mask_bool, d2_intra, -jnp.inf)
    intra_row = jnp.sqrt(
        jnp.maximum(jnp.max(d2_intra, axis=1, keepdims=True), 1e-12)).T  # (1, P)

    # ---- inter-class: min distance center_i -> other centers ----------------
    gram = lax.dot_general(centers, centers, dimension_numbers=_NT,
                           preferred_element_type=jnp.float32)    # (P, P), no centers.T
    d2_inter = cc_col + cc_col.T - 2.0 * gram
    row = lax.broadcasted_iota(jnp.int32, (p, p), 0)
    col = lax.broadcasted_iota(jnp.int32, (p, p), 1)
    d2_inter = jnp.where(row == col, jnp.inf, d2_inter)
    inter_row = jnp.sqrt(
        jnp.maximum(jnp.min(d2_inter, axis=0, keepdims=True), 1e-12))    # (1, P)

    hinge = jnp.maximum(intra_row - inter_row + jnp.float32(margin), 0.0)
    loss_ref[...] = jnp.sum(hinge, axis=1, keepdims=True) * jnp.float32(1.0 / p)
    intra_ref[...] = intra_row
    inter_ref[...] = inter_row


# --------------------------------------------------------------------------- #
# Wrappers
# --------------------------------------------------------------------------- #
def _common_call(kernel, in_arrays, in_specs, P, cost):
    out = pl.pallas_call(
        kernel,
        out_shape=(
            jax.ShapeDtypeStruct((1, 1), jnp.float32),
            jax.ShapeDtypeStruct((1, P), jnp.float32),   # lane-dense outputs
            jax.ShapeDtypeStruct((1, P), jnp.float32),
        ),
        grid=(1,),
        in_specs=in_specs,
        out_specs=(
            pl.BlockSpec((1, 1), lambda i: (0, 0)),
            pl.BlockSpec((1, P), lambda i: (0, 0)),
            pl.BlockSpec((1, P), lambda i: (0, 0)),
        ),
        compiler_params=pltpu.CompilerParams(dimension_semantics=("arbitrary",)),
        cost_estimate=cost,
    )(*in_arrays)
    loss, intra, inter = out
    return loss[0, 0], intra[0], inter[0]


def _cluster_loss_ordered(features, margin, P, K):
    B, D = features.shape
    feats = features.astype(jnp.float32)
    kernel = functools.partial(_ordered_cluster_kernel, float(margin), int(P), int(K))
    cost = pl.CostEstimate(flops=int(6 * B * D + 2 * P * P * D + 8 * P * P),
                           transcendentals=int(2 * P),
                           bytes_accessed=int(4 * (B * D + 2 * P + 1)))
    in_specs = [pl.BlockSpec((B, D), lambda i: (0, 0))]
    return _common_call(kernel, (feats,), in_specs, int(P), cost)


def _cluster_loss_general(features, targets, unique_labels, margin):
    B, D = features.shape
    P = int(unique_labels.shape[0])
    feats = features.astype(jnp.float32)
    tgt2 = targets.astype(jnp.int32).reshape(1, B)
    uniq2 = unique_labels.astype(jnp.int32).reshape(P, 1)
    kernel = functools.partial(_masked_cluster_kernel, float(margin))
    cost = pl.CostEstimate(flops=int(4 * P * B * D + 2 * P * P * D + 6 * B * D),
                           transcendentals=int(2 * P),
                           bytes_accessed=int(4 * (B * D + B + P + 2 * P + 1)))
    in_specs = [
        pl.BlockSpec((B, D), lambda i: (0, 0)),
        pl.BlockSpec((1, B), lambda i: (0, 0)),
        pl.BlockSpec((P, 1), lambda i: (0, 0)),
    ]
    return _common_call(kernel, (feats, tgt2, uniq2), in_specs, P, cost)


def cluster_loss(features, targets, *, margin=10.0, ordered=True,
                 ids_per_batch=16, imgs_per_id=4):
    """Equivalent of ClusterLoss.forward -> (loss, dist_ap, dist_an)."""
    B, _ = features.shape
    if ordered and B == ids_per_batch * imgs_per_id:
        # ordered p*k fast path (same unique_labels = targets[0::imgs_per_id]
        # semantics; assumes the p groups carry distinct ids, as the sampler does).
        # NOTE(v7x): the whole (B, D) block is loaded into VMEM; at realistic
        # shapes (B<=64, D<=8K) this is far below even v7x's 64 MiB VMEM.
        return _cluster_loss_ordered(features, margin, ids_per_batch, imgs_per_id)
    # TODO(synk): dynamic-size torch.unique has no static-shape Pallas equivalent;
    # this eager jnp.unique fallback only works outside jit (P must be static).
    unique_labels = jnp.unique(targets)
    return _cluster_loss_general(features, targets, unique_labels, margin)


# --------------------------------------------------------------------------- #
# Pure-JAX reference (mirrors the PyTorch module's math) + self-test
# --------------------------------------------------------------------------- #
def _reference(features, targets, unique_labels, margin):
    feats = features.astype(jnp.float32)
    mask = (unique_labels[:, None] == targets[None, :]).astype(jnp.float32)
    centers = (mask @ feats) / mask.sum(1, keepdims=True)
    xx = jnp.sum(feats ** 2, axis=1)
    cc = jnp.sum(centers ** 2, axis=1)
    d2_intra = cc[:, None] + xx[None, :] - 2.0 * centers @ feats.T
    d2_intra = jnp.where(mask > 0, d2_intra, -jnp.inf)
    intra = jnp.sqrt(jnp.maximum(d2_intra.max(1), 1e-12))
    d2_inter = cc[:, None] + cc[None, :] - 2.0 * centers @ centers.T
    d2_inter = jnp.where(jnp.eye(centers.shape[0], dtype=bool), jnp.inf, d2_inter)
    inter = jnp.sqrt(jnp.maximum(d2_inter.min(1), 1e-12))
    loss = jnp.mean(jnp.maximum(intra - inter + margin, 0.0))
    return loss, intra, inter


if __name__ == "__main__":
    ids_per_batch = 4
    imgs_per_id = 4
    B = ids_per_batch * imgs_per_id          # 16
    D = 32
    margin = 10.0

    key = jax.random.PRNGKey(0)
    kf, kp = jax.random.split(key)
    features = jax.random.normal(kf, (B, D), dtype=jnp.float32)
    # ordered batch: p ids, k images each -> [0,0,0,0, 1,1,1,1, 2,..., 3,...]
    targets = jnp.repeat(jnp.arange(ids_per_batch, dtype=jnp.int32), imgs_per_id)

    # --- ordered fast-path kernel ---
    loss, dist_ap, dist_an = cluster_loss(
        features, targets, margin=margin, ordered=True,
        ids_per_batch=ids_per_batch, imgs_per_id=imgs_per_id)
    jax.block_until_ready((loss, dist_ap, dist_an))
    uniq = targets[0:B:imgs_per_id]
    ref_loss, ref_ap, ref_an = _reference(features, targets, uniq, margin)
    assert jnp.allclose(loss, ref_loss, rtol=1e-4, atol=1e-4)
    assert jnp.allclose(dist_ap, ref_ap, rtol=1e-4, atol=1e-4)
    assert jnp.allclose(dist_an, ref_an, rtol=1e-4, atol=1e-4)

    # --- general (mask) fallback kernel on a shuffled batch ---
    perm = jax.random.permutation(kp, B)
    f2, t2 = features[perm], targets[perm]
    loss2, ap2, an2 = cluster_loss(
        f2, t2, margin=margin, ordered=False,
        ids_per_batch=ids_per_batch, imgs_per_id=imgs_per_id)
    jax.block_until_ready((loss2, ap2, an2))
    uniq2 = jnp.unique(t2)
    rl2, ra2, rn2 = _reference(f2, t2, uniq2, margin)
    assert jnp.allclose(loss2, rl2, rtol=1e-4, atol=1e-4)
    assert jnp.allclose(ap2, ra2, rtol=1e-4, atol=1e-4)
    assert jnp.allclose(an2, rn2, rtol=1e-4, atol=1e-4)

    print("KERNEL_OK")
</pallas_src>

<mosaic_0001>
module attributes {stable_mosaic.version = 11 : i64} {
  func.func @_ordered_cluster_kernel(%arg0: i32, %arg1: memref<16x32xf32, #tpu.memory_space<vmem>>, %arg2: memref<1x1xf32, #tpu.memory_space<vmem>>, %arg3: memref<1x4xf32, #tpu.memory_space<vmem>>, %arg4: memref<1x4xf32, #tpu.memory_space<vmem>>) attributes {dimension_semantics = [#tpu.dimension_semantics<arbitrary>], iteration_bounds = array<i64: 1>, scalar_prefetch = 0 : i64, scratch_operands = 0 : i64, tpu.core_type = #tpu.core_type<tc>, window_params = [{pipeline_mode = #tpu.pipeline_mode<synchronous>, transform_indices = @transform_0, window_bounds = array<i64: 16, 32>}, {pipeline_mode = #tpu.pipeline_mode<synchronous>, transform_indices = @transform_1, window_bounds = array<i64: 1, 1>}, {pipeline_mode = #tpu.pipeline_mode<synchronous>, transform_indices = @transform_2, window_bounds = array<i64: 1, 4>}, {pipeline_mode = #tpu.pipeline_mode<synchronous>, transform_indices = @transform_3, window_bounds = array<i64: 1, 4>}]} {
    %c0 = arith.constant 0 : index
    %c0_0 = arith.constant 0 : index
    %0 = vector.load %arg1[%c0, %c0_0] : memref<16x32xf32, #tpu.memory_space<vmem>>, vector<16x32xf32>
    %1 = vector.shape_cast %0 : vector<16x32xf32> to vector<4x4x32xf32>
    %cst = arith.constant dense<0.000000e+00> : vector<4x32xf32>
    %2 = vector.multi_reduction <add>, %1, %cst [1] : vector<4x4x32xf32> to vector<4x32xf32>
    %cst_1 = arith.constant 2.500000e-01 : f32
    %3 = vector.broadcast %cst_1 : f32 to vector<4x32xf32>
    %4 = arith.mulf %2, %3 : vector<4x32xf32>
    %5 = vector.shape_cast %4 : vector<4x32xf32> to vector<4x1x32xf32>
    %6 = vector.broadcast %5 : vector<4x1x32xf32> to vector<4x4x32xf32>
    %7 = arith.subf %1, %6 : vector<4x4x32xf32>
    %8 = arith.mulf %7, %7 : vector<4x4x32xf32>
    %cst_2 = arith.constant dense<0.000000e+00> : vector<4x4xf32>
    %9 = vector.multi_reduction <add>, %8, %cst_2 [2] : vector<4x4x32xf32> to vector<4x4xf32>
    %cst_3 = arith.constant dense<0xFF800000> : vector<4xf32>
    %10 = vector.multi_reduction <maximumf>, %9, %cst_3 [1] : vector<4x4xf32> to vector<4xf32>
    %11 = vector.shape_cast %10 : vector<4xf32> to vector<4x1xf32>
    %cst_4 = arith.constant 9.99999996E-13 : f32
    %12 = vector.broadcast %cst_4 : f32 to vector<4x1xf32>
    %13 = arith.maximumf %11, %12 : vector<4x1xf32>
    %14 = math.sqrt %13 : vector<4x1xf32>
    %15 = tpu.transpose %14, [1, 0] : vector<4x1xf32> -> vector<1x4xf32>
    %cst_5 = arith.constant dense<0.000000e+00> : vector<4x4xf32>
    %16 = tpu.matmul %4, %4, %cst_5 {dimension_numbers = #tpu.dot_dimension_numbers<[1], [1], [0], [0], [0, 0, 1, 0], [], []>} : vector<4x32xf32>, vector<4x32xf32>, vector<4x4xf32> -> vector<4x4xf32>
    %17 = arith.mulf %4, %4 : vector<4x32xf32>
    %cst_6 = arith.constant dense<0.000000e+00> : vector<4xf32>
    %18 = vector.multi_reduction <add>, %17, %cst_6 [1] : vector<4x32xf32> to vector<4xf32>
    %19 = vector.shape_cast %18 : vector<4xf32> to vector<4x1xf32>
    %20 = tpu.transpose %19, [1, 0] : vector<4x1xf32> -> vector<1x4xf32>
    %21 = vector.broadcast %19 : vector<4x1xf32> to vector<4x4xf32>
    %22 = vector.broadcast %20 : vector<1x4xf32> to vector<4x4xf32>
    %23 = arith.addf %21, %22 : vector<4x4xf32>
    %cst_7 = arith.constant 2.000000e+00 : f32
    %24 = vector.broadcast %cst_7 : f32 to vector<4x4xf32>
    %25 = arith.mulf %24, %16 : vector<4x4xf32>
    %26 = arith.subf %23, %25 : vector<4x4xf32>
    %27 = tpu.iota {dimensions = array<i32: 0>} : vector<4x4xi32>
    %28 = tpu.iota {dimensions = array<i32: 1>} : vector<4x4xi32>
    %29 = arith.cmpi eq, %27, %28 : vector<4x4xi32>
    %cst_8 = arith.constant 0x7F800000 : f32
    %30 = vector.broadcast %cst_8 : f32 to vector<4x4xf32>
    %31 = arith.select %29, %30, %26 : vector<4x4xi1>, vector<4x4xf32>
    %cst_9 = arith.constant dense<0x7F800000> : vector<4xf32>
    %32 = vector.multi_reduction <minimumf>, %31, %cst_9 [0] : vector<4x4xf32> to vector<4xf32>
    %33 = vector.shape_cast %32 : vector<4xf32> to vector<1x4xf32>
    %cst_10 = arith.constant 9.99999996E-13 : f32
    %34 = vector.broadcast %cst_10 : f32 to vector<1x4xf32>
    %35 = arith.maximumf %33, %34 : vector<1x4xf32>
    %36 = math.sqrt %35 : vector<1x4xf32>
    %37 = arith.subf %15, %36 : vector<1x4xf32>
    %cst_11 = arith.constant 1.000000e+01 : f32
    %38 = vector.broadcast %cst_11 : f32 to vector<1x4xf32>
    %39 = arith.addf %37, %38 : vector<1x4xf32>
    %cst_12 = arith.constant 0.000000e+00 : f32
    %40 = vector.broadcast %cst_12 : f32 to vector<1x4xf32>
    %41 = arith.maximumf %39, %40 : vector<1x4xf32>
    %cst_13 = arith.constant dense<0.000000e+00> : vector<1xf32>
    %42 = vector.multi_reduction <add>, %41, %cst_13 [1] : vector<1x4xf32> to vector<1xf32>
    %43 = vector.shape_cast %42 : vector<1xf32> to vector<1x1xf32>
    %cst_14 = arith.constant 2.500000e-01 : f32
    %44 = vector.broadcast %cst_14 : f32 to vector<1x1xf32>
    %45 = arith.mulf %43, %44 : vector<1x1xf32>
    %c0_15 = arith.constant 0 : index
    %c0_16 = arith.constant 0 : index
    %46 = vector.load %arg2[%c0_15, %c0_16] : memref<1x1xf32, #tpu.memory_space<vmem>>, vector<1x1xf32>
    tpu.vector_store %arg2[%c0_15, %c0_16], %45 {strides = array<i32>} : memref<1x1xf32, #tpu.memory_space<vmem>>, vector<1x1xf32>,
    %c0_17 = arith.constant 0 : index
    %c0_18 = arith.constant 0 : index
    %47 = vector.load %arg3[%c0_17, %c0_18] : memref<1x4xf32, #tpu.memory_space<vmem>>, vector<1x4xf32>
    tpu.vector_store %arg3[%c0_17, %c0_18], %15 {strides = array<i32>} : memref<1x4xf32, #tpu.memory_space<vmem>>, vector<1x4xf32>,
    %c0_19 = arith.constant 0 : index
    %c0_20 = arith.constant 0 : index
    %48 = vector.load %arg4[%c0_19, %c0_20] : memref<1x4xf32, #tpu.memory_space<vmem>>, vector<1x4xf32>
    tpu.vector_store %arg4[%c0_19, %c0_20], %36 {strides = array<i32>} : memref<1x4xf32, #tpu.memory_space<vmem>>, vector<1x4xf32>,
    return
  }
  func.func @transform_0(%arg0: i32) -> (i32, i32) {
    %c0_i32 = arith.constant 0 : i32
    %c0_i32_0 = arith.constant 0 : i32
    %c0_i32_1 = arith.constant 0 : i32
    return %c0_i32, %c0_i32_0 : i32, i32
  }
  func.func @transform_1(%arg0: i32) -> (i32, i32) {
    %c0_i32 = arith.constant 0 : i32
    %c0_i32_0 = arith.constant 0 : i32
    %c0_i32_1 = arith.constant 0 : i32
    return %c0_i32, %c0_i32_0 : i32, i32
  }
  func.func @transform_2(%arg0: i32) -> (i32, i32) {
    %c0_i32 = arith.constant 0 : i32
    %c0_i32_0 = arith.constant 0 : i32
    %c0_i32_1 = arith.constant 0 : i32
    return %c0_i32, %c0_i32_0 : i32, i32
  }
  func.func @transform_3(%arg0: i32) -> (i32, i32) {
    %c0_i32 = arith.constant 0 : i32
    %c0_i32_0 = arith.constant 0 : i32
    %c0_i32_1 = arith.constant 0 : i32
    return %c0_i32, %c0_i32_0 : i32, i32
  }
}

</mosaic_0001>

<llo_original>
// kernel: tpu_custom_call.1
$region0: #{tpu_custom_call.1}
  #allocation0 [shape = 'u32[]', space=smem, size = 0x4, offset = 0x4, fixed_abs, tag = 'smem constant byte address 0x4 - core index']
  #allocation1 [shape = 'u32[144,128]{1,0:T(1,128)}', space=vmem, size = 0x12000, scoped, tag = 'internal scratch']
  %s0 = inlined_call_operand.hbm [shape: f32[16,32], index: 0, kind: input, shape index: {}]
  %s1 = inlined_call_operand.hbm [shape: f32[1,1], index: 1, kind: output, shape index: {0}]
  %s2 = inlined_call_operand.hbm [shape: f32[1,4], index: 2, kind: output, shape index: {1}]
  %s3 = inlined_call_operand.hbm [shape: f32[1,4], index: 3, kind: output, shape index: {2}]
  %4 = xla_tuple %s1, %s2, %s3
  %s5 = sld [smem:[#allocation0]]
  $region34: #{tpu_custom_call.1} parent=0
    _
  %s7 = ssub.s32 1, %s5
  %s8 = scalar_select 0, %s7, %s5
  $region1: #{tpu_custom_call.1} parent=0
    #allocation2 [shape = 'u8[8192]{0}', space=vmem, size = 0x2000, scoped, tag = 'input window, operand 0, single buffered']
    #allocation3 [shape = 's32[1]{0}', space=sflag, size = 0x4, scoped, tag = 'scoped memory for tpu_custom_call.1']
    #allocation4 [shape = 's32[1]{0}', space=sflag, size = 0x4, scoped, tag = 'scoped memory for tpu_custom_call.1']
    #allocation5 [shape = 'u8[512]{0}', space=vmem, size = 0x400, scoped, tag = 'output window, operand 0, single buffered']
    #allocation6 [shape = 'u8[512]{0}', space=vmem, size = 0x400, scoped, tag = 'output window, operand 1, single buffered']
    #allocation7 [shape = 's32[1]{0}', space=sflag, size = 0x4, scoped, tag = 'scoped memory for tpu_custom_call.1']
    #allocation8 [shape = 'u8[512]{0}', space=vmem, size = 0x400, scoped, tag = 'output window, operand 2, single buffered']
    %9 = vsyncpa [#allocation3], 0
    %10 = vsyncpa [#allocation4], 0
    %11 = vsyncpa [#allocation7], 0
    // Predicated region
    $region2: #{tpu_custom_call.1} parent=1 // pred_check
      _
    $region3: #{tpu_custom_call.1} parent=1 // pred_check_branch
      %13 = sbr.rel (0) target = $region5
    $region4: #{tpu_custom_call.1} parent=1 // pred_region
      %s15 = ssub.s32 256, 256
      %16 = vsyncadd [#allocation3], %s15
      %s17 = sshll.u32 [#allocation2], 4
      %s18 = int_to_ptr.vmem [resolvable:$true] %s17
      %23 = dma.hbm_to_vmem [thread:$0]  %s0, 256, %s18, [#allocation3], 128, 128, 8
    $region5: #{tpu_custom_call.1} parent=1 // pred_fallthru
      _
    // Predicated region
    $region6: #{tpu_custom_call.1} parent=1 // pred_check
      _
    $region7: #{tpu_custom_call.1} parent=1 // pred_check_branch
      %25 = sbr.rel (0) target = $region9
    $region8: #{tpu_custom_call.1} parent=1 // pred_region
      %26 = dma.done [#allocation3], 256
    $region9: #{tpu_custom_call.1} parent=1 // pred_fallthru
      _
    %v27 = vld [vmem:[#allocation2] sm:$0xff]
    %v28 = vld [vmem:[#allocation2 + $0x8] sm:$0xff]
    %v31 = vcombine.high %v27, %v27
    %v32 = vcombine.high %v28, %v28
    %vm35 = vcmask 257024
    %v36 = vsel %vm35, %v27, 0.0
    %v37 = vrot.slane %v36, 4
    %v38 = vadd.f32 %v36, %v37
    %v39 = vrot.slane %v38, 2
    %v40 = vadd.f32 %v38, %v39
    %v41 = vrot.slane %v40, 1
    %v42 = vadd.f32 %v40, %v41
    %v43 = vsel %vm35, %v31, 0.0
    %v44 = vrot.slane %v43, 4
    %v45 = vadd.f32 %v43, %v44
    %v46 = vrot.slane %v45, 2
    %v47 = vadd.f32 %v45, %v46
    %v48 = vrot.slane %v47, 1
    %v49 = vadd.f32 %v47, %v48
    %v50 = vsel %vm35, %v28, 0.0
    %v51 = vrot.slane %v50, 4
    %v52 = vadd.f32 %v50, %v51
    %v53 = vrot.slane %v52, 2
    %v54 = vadd.f32 %v52, %v53
    %v55 = vrot.slane %v54, 1
    %v56 = vadd.f32 %v54, %v55
    %v57 = vsel %vm35, %v32, 0.0
    %v58 = vrot.slane %v57, 4
    %v59 = vadd.f32 %v57, %v58
    %v60 = vrot.slane %v59, 2
    %v61 = vadd.f32 %v59, %v60
    %v62 = vrot.slane %v61, 1
    %v63 = vadd.f32 %v61, %v62
    %v64 = vmul.f32 %v42, 0.25
    %v65 = vmul.f32 %v49, 0.25
    %v66 = vmul.f32 %v56, 0.25
    %v67 = vmul.f32 %v63, 0.25
    %v68 = vsub.f32 %v27, %v64
    %v69 = vsub.f32 %v31, %v65
    %v70 = vsub.f32 %v28, %v66
    %v71 = vsub.f32 %v32, %v67
    %v72 = vmul.f32 %v68, %v68
    %v73 = vmul.f32 %v69, %v69
    %v74 = vmul.f32 %v70, %v70
    %v75 = vmul.f32 %v71, %v71
    %v76 = vsel %vm35, %v72, 0.0
    %77 = vadd.xlane.f32.xlu0 %v76
    %v78 = vpop.xlane.xlu0 %77
    %v79 = vsel %vm35, %v73, 0.0
    %80 = vadd.xlane.f32.xlu0 %v79
    %v81 = vpop.xlane.xlu0 %80
    %v82 = vsel %vm35, %v74, 0.0
    %83 = vadd.xlane.f32.xlu0 %v82
    %v84 = vpop.xlane.xlu0 %83
    %v85 = vsel %vm35, %v75, 0.0
    %86 = vadd.xlane.f32.xlu0 %v85
    %v87 = vpop.xlane.xlu0 %86
    %v92 = vlaneseq
    %v93 = vand.u32 %v92, 127
    %v94 = vlaneseq
    %v95 = vshrl.u32 %v94, 7
    %v96 = vsub.s32 %v93, %v95
    %v97 = vrot.slane %v78, %v96
    %v98 = vlaneseq
    %v99 = vshrl.u32 %v98, 7
    %v100 = vsub.s32 %v93, %v99
    %v101 = vrot.slane %v81, %v100
    %v102 = vlaneseq
    %v103 = vshrl.u32 %v102, 7
    %v104 = vsub.s32 %v93, %v103
    %v105 = vrot.slane %v84, %v104
    %v106 = vlaneseq
    %v107 = vshrl.u32 %v106, 7
    %v108 = vsub.s32 %v93, %v107
    %v109 = vrot.slane %v87, %v108
    %vm110 = vcmask 1041409
    %v111 = vsel %vm110, %v101, %v97
    %vm112 = vcmask 1042434
    %v113 = vsel %vm112, %v105, %v111
    %vm114 = vcmask 1043459
    %v115 = vsel %vm114, %v109, %v113
    %vm117 = vcmask 27648
    %v118 = vsel %vm117, %v115, -inf
    %119 = vmax.xlane.f32.xlu0 %v118
    %v120 = vpop.xlane.xlu0 %119
    %v121 = vmax.f32 %v120, 1e-12
    %v122 = vrsqrt.pop %v121
    %v123 = vmul.f32 %v121, %v122
    %vm124 = vcmp.eq.f32.partialorder %v121, inf
    %v125 = vsel %vm124, %v121, %v123
    %vm126 = vcmp.eq.f32.partialorder %v121, 0.0
    %v127 = vand.u32 %v121, 2147483648
    %v128 = vsel %vm126, %v127, %v125
    %129 = vxpose.xlu0.b32.start [1/16] %v128, 128
    %130 = vxpose.xlu0.b32.cont [2/16] 0.0, 128
    %131 = vxpose.xlu0.b32.cont [3/16] 0.0, 128
    %132 = vxpose.xlu0.b32.cont [4/16] 0.0, 128
    %133 = vxpose.xlu0.b32.cont [5/16] 0.0, 128
    %134 = vxpose.xlu0.b32.cont [6/16] 0.0, 128
    %135 = vxpose.xlu0.b32.cont [7/16] 0.0, 128
    %136 = vxpose.xlu0.b32.cont [8/16] 0.0, 128
    %137 = vxpose.xlu0.b32.cont [9/16] 0.0, 128
    %138 = vxpose.xlu0.b32.cont [10/16] 0.0, 128
    %139 = vxpose.xlu0.b32.cont [11/16] 0.0, 128
    %140 = vxpose.xlu0.b32.cont [12/16] 0.0, 128
    %141 = vxpose.xlu0.b32.cont [13/16] 0.0, 128
    %142 = vxpose.xlu0.b32.cont [14/16] 0.0, 128
    %143 = vxpose.xlu0.b32.cont [15/16] 0.0, 128
    %144 = vxpose.xlu0.b32.end [16/16] 0.0, 128
    %v145 = vpop.trf.xlu0
    %v146 = vpop.trf.xlu0
    %v147 = vpop.trf.xlu0
    %v148 = vpop.trf.xlu0
    %v149 = vpop.trf.xlu0
    %v150 = vpop.trf.xlu0
    %v151 = vpop.trf.xlu0
    %v152 = vpop.trf.xlu0
    %v153 = vpop.trf.xlu0
    %v154 = vpop.trf.xlu0
    %v155 = vpop.trf.xlu0
    %v156 = vpop.trf.xlu0
    %v157 = vpop.trf.xlu0
    %v158 = vpop.trf.xlu0
    %v159 = vpop.trf.xlu0
    %v160 = vpop.trf.xlu0
    %v165 = vsel %vm110, %v65, %v64
    %v166 = vsel %vm112, %v66, %v165
    %v167 = vsel %vm114, %v67, %v166
    %vm168 = vcmask 261120
    %v169 = vsel %vm168, %v167, 0
    %171 = vmatprep.subr.mxu0 0.0
    %172 = vmatpush1.xpose.msra.mxu0 %v169
    %173 = vmatprep.subr.mxu0 0.0
    %174 = vmatpush1.xpose.msra.mxu0 0.0
    %175 = vmatprep.subr.mxu0 0.0
    %176 = vmatpush1.xpose.msra.mxu0 0.0
    %177 = vmatprep.subr.mxu0 0.0
    %178 = vmatpush1.xpose.msra.mxu0 0.0
    %179 = vmatprep.subr.mxu0 0.0
    %180 = vmatpush1.xpose.msra.mxu0 0.0
    %181 = vmatprep.subr.mxu0 0.0
    %182 = vmatpush1.xpose.msra.mxu0 0.0
    %183 = vmatprep.subr.mxu0 0.0
    %184 = vmatpush1.xpose.msra.mxu0 0.0
    %185 = vmatprep.subr.mxu0 0.0
    %186 = vmatpush1.xpose.msra.mxu0 0.0
    %187 = vmatprep.subr.mxu0 0.0
    %188 = vmatpush1.xpose.msra.mxu0 0.0
    %189 = vmatprep.subr.mxu0 0.0
    %190 = vmatpush1.xpose.msra.mxu0 0.0
    %191 = vmatprep.subr.mxu0 0.0
    %192 = vmatpush1.xpose.msra.mxu0 0.0
    %193 = vmatprep.subr.mxu0 0.0
    %194 = vmatpush1.xpose.msra.mxu0 0.0
    %195 = vmatprep.subr.mxu0 0.0
    %196 = vmatpush1.xpose.msra.mxu0 0.0
    %197 = vmatprep.subr.mxu0 0.0
    %198 = vmatpush1.xpose.msra.mxu0 0.0
    %199 = vmatprep.subr.mxu0 0.0
    %200 = vmatpush1.xpose.msra.mxu0 0.0
    %201 = vmatprep.subr.mxu0 0.0
    %202 = vmatpush1.xpose.msra.mxu0 0.0
    %203 = vmatprep.subr.mxu0 0.0
    %204 = vmatpush1.xpose.msra.mxu0 0.0
    %205 = vmatprep.subr.mxu0 0.0
    %206 = vmatpush1.xpose.msra.mxu0 0.0
    %207 = vmatprep.subr.mxu0 0.0
    %208 = vmatpush1.xpose.msra.mxu0 0.0
    %209 = vmatprep.subr.mxu0 0.0
    %210 = vmatpush1.xpose.msra.mxu0 0.0
    %211 = vmatprep.subr.mxu0 0.0
    %212 = vmatpush1.xpose.msra.mxu0 0.0
    %213 = vmatprep.subr.mxu0 0.0
    %214 = vmatpush1.xpose.msra.mxu0 0.0
    %215 = vmatprep.subr.mxu0 0.0
    %216 = vmatpush1.xpose.msra.mxu0 0.0
    %217 = vmatprep.subr.mxu0 0.0
    %218 = vmatpush1.xpose.msra.mxu0 0.0
    %219 = vmatprep.subr.mxu0 0.0
    %220 = vmatpush1.xpose.msra.mxu0 0.0
    %221 = vmatprep.subr.mxu0 0.0
    %222 = vmatpush1.xpose.msra.mxu0 0.0
    %223 = vmatprep.subr.mxu0 0.0
    %224 = vmatpush1.xpose.msra.mxu0 0.0
    %225 = vmatprep.subr.mxu0 0.0
    %226 = vmatpush1.xpose.msra.mxu0 0.0
    %227 = vmatprep.subr.mxu0 0.0
    %228 = vmatpush1.xpose.msra.mxu0 0.0
    %229 = vmatprep.subr.mxu0 0.0
    %230 = vmatpush1.xpose.msra.mxu0 0.0
    %231 = vmatprep.subr.mxu0 0.0
    %232 = vmatpush1.xpose.msra.mxu0 0.0
    %233 = vmatprep.subr.mxu0 0.0
    %234 = vmatpush1.xpose.msra.mxu0 0.0
    %235 = vmatprep.mubr.f32.mxu0 0.0
    %236 = vmatmul.mubr.f32.gmra.mrb[0].mxu0 %v169
    %v237 = vpop.f32.mrb[0].mxu0
    %v238 = vadd.f32 0.0, %v237
    %v239 = vpop.f32.mrb[0].mxu0
    %240 = vdwg.mxu0
    %v241 = vmul.f32 %v64, %v64
    %v242 = vmul.f32 %v65, %v65
    %v243 = vmul.f32 %v66, %v66
    %v244 = vmul.f32 %v67, %v67
    %v249 = vsel %vm110, %v242, %v241
    %v250 = vsel %vm112, %v243, %v249
    %v251 = vsel %vm114, %v244, %v250
    %v253 = vsel %vm35, %v251, 0.0
    %254 = vadd.xlane.f32.xlu0 %v253
    %v255 = vpop.xlane.xlu0 %254
    %256 = vxpose.xlu0.b32.start [1/16] %v255, 128
    %257 = vxpose.xlu0.b32.cont [2/16] 0.0, 128
    %258 = vxpose.xlu0.b32.cont [3/16] 0.0, 128
    %259 = vxpose.xlu0.b32.cont [4/16] 0.0, 128
    %260 = vxpose.xlu0.b32.cont [5/16] 0.0, 128
    %261 = vxpose.xlu0.b32.cont [6/16] 0.0, 128
    %262 = vxpose.xlu0.b32.cont [7/16] 0.0, 128
    %263 = vxpose.xlu0.b32.cont [8/16] 0.0, 128
    %264 = vxpose.xlu0.b32.cont [9/16] 0.0, 128
    %265 = vxpose.xlu0.b32.cont [10/16] 0.0, 128
    %266 = vxpose.xlu0.b32.cont [11/16] 0.0, 128
    %267 = vxpose.xlu0.b32.cont [12/16] 0.0, 128
    %268 = vxpose.xlu0.b32.cont [13/16] 0.0, 128
    %269 = vxpose.xlu0.b32.cont [14/16] 0.0, 128
    %270 = vxpose.xlu0.b32.cont [15/16] 0.0, 128
    %271 = vxpose.xlu0.b32.end [16/16] 0.0, 128
    %v272 = vpop.trf.xlu0
    %v273 = vpop.trf.xlu0
    %v274 = vpop.trf.xlu0
    %v275 = vpop.trf.xlu0
    %v276 = vpop.trf.xlu0
    %v277 = vpop.trf.xlu0
    %v278 = vpop.trf.xlu0
    %v279 = vpop.trf.xlu0
    %v280 = vpop.trf.xlu0
    %v281 = vpop.trf.xlu0
    %v282 = vpop.trf.xlu0
    %v283 = vpop.trf.xlu0
    %v284 = vpop.trf.xlu0
    %v285 = vpop.trf.xlu0
    %v286 = vpop.trf.xlu0
    %v287 = vpop.trf.xlu0
    %v288 = vlaneseq
    %v289 = vshrl.u32 %v288, 7
    %v290 = vsub.s32 0, %v289
    %v291 = vrot.slane %v272, %v290
    %v292 = vadd.f32 %v255, %v291
    %v293 = vmul.f32 %v238, 2.0
    %v294 = vsub.f32 %v292, %v293
    %v295 = vlaneseq
    %v296 = vshrl.u32 %v295, 7
    %vm297 = vcmp.eq.s32.totalorder %v296, %v93
    %v298 = vsel %vm297, inf, %v294
    %v299 = vsel %vm117, %v298, inf
    %v300 = vrot.slane %v299, 4
    %v301 = vmin.f32 %v299, %v300
    %v302 = vrot.slane %v301, 2
    %v303 = vmin.f32 %v301, %v302
    %v304 = vrot.slane %v303, 1
    %v305 = vmin.f32 %v303, %v304
    %v306 = vmax.f32 %v305, 1e-12
    %v307 = vrsqrt.pop %v306
    %v308 = vmul.f32 %v306, %v307
    %vm309 = vcmp.eq.f32.partialorder %v306, inf
    %v310 = vsel %vm309, %v306, %v308
    %vm311 = vcmp.eq.f32.partialorder %v306, 0.0
    %v312 = vand.u32 %v306, 2147483648
    %v313 = vsel %vm311, %v312, %v310
    %v314 = vsub.f32 %v145, %v313
    %v315 = vadd.f32 %v314, 10.0
    %v316 = vmax.f32 %v315, 0.0
    %vm317 = vcmask 24576
    %v318 = vsel %vm317, %v316, 0.0
    %319 = vadd.xlane.f32.xlu0 %v318
    %v320 = vpop.xlane.xlu0 %319
    %v321 = vmul.f32 %v320, 0.25
    %vm322 = vcmask 0
    %323 = vst.msk [vmem:[#allocation5] sm:$0x1] %vm322, %v321
    %324 = vst.msk [vmem:[#allocation6] sm:$0x1] %vm317, %v145
    %325 = vst.msk [vmem:[#allocation8] sm:$0x1] %vm317, %v313
    // Predicated region
    $region10: #{tpu_custom_call.1} parent=1 // pred_check
      _
    $region11: #{tpu_custom_call.1} parent=1 // pred_check_branch
      %327 = sbr.rel (0) target = $region13
    $region12: #{tpu_custom_call.1} parent=1 // pred_region
      %s329 = ssub.s32 16, 16
      %330 = vsyncadd [#allocation4], %s329
      %s332 = sshll.u32 [#allocation5], 4
      %s333 = int_to_ptr.vmem [resolvable:$true] %s332
      %335 = dma.vmem_to_hbm [thread:$0]  %s333, 16, %s1, [#allocation4]
    $region13: #{tpu_custom_call.1} parent=1 // pred_fallthru
      _
    // Predicated region
    $region14: #{tpu_custom_call.1} parent=1 // pred_check
      _
    $region15: #{tpu_custom_call.1} parent=1 // pred_check_branch
      %337 = sbr.rel (0) target = $region17
    $region16: #{tpu_custom_call.1} parent=1 // pred_region
      %s339 = ssub.s32 16, 16
      %340 = vsyncadd [#allocation7], %s339
      %s342 = sshll.u32 [#allocation6], 4
      %s343 = int_to_ptr.vmem [resolvable:$true] %s342
      %345 = dma.vmem_to_hbm [thread:$0]  %s343, 16, %s2, [#allocation7]
    $region17: #{tpu_custom_call.1} parent=1 // pred_fallthru
      _
    // Predicated region
    $region18: #{tpu_custom_call.1} parent=1 // pred_check
      _
    $region19: #{tpu_custom_call.1} parent=1 // pred_check_branch
      %347 = sbr.rel (0) target = $region21
    $region20: #{tpu_custom_call.1} parent=1 // pred_region
      %s349 = ssub.s32 16, 16
      %350 = vsyncadd [#allocation7], %s349
      %s352 = sshll.u32 [#allocation8], 4
      %s353 = int_to_ptr.vmem [resolvable:$true] %s352
      %355 = dma.vmem_to_hbm [thread:$0]  %s353, 16, %s3, [#allocation7]
    $region21: #{tpu_custom_call.1} parent=1 // pred_fallthru
      _
    // Predicated region
    $region22: #{tpu_custom_call.1} parent=1 // pred_check
      _
    $region23: #{tpu_custom_call.1} parent=1 // pred_check_branch
      %357 = sbr.rel (0) target = $region25
    $region24: #{tpu_custom_call.1} parent=1 // pred_region
      %358 = dma.done [#allocation4], 16
    $region25: #{tpu_custom_call.1} parent=1 // pred_fallthru
      _
    // Predicated region
    $region26: #{tpu_custom_call.1} parent=1 // pred_check
      _
    $region27: #{tpu_custom_call.1} parent=1 // pred_check_branch
      %360 = sbr.rel (0) target = $region29
    $region28: #{tpu_custom_call.1} parent=1 // pred_region
      %361 = dma.done [#allocation7], 16
    $region29: #{tpu_custom_call.1} parent=1 // pred_fallthru
      _
    // Predicated region
    $region30: #{tpu_custom_call.1} parent=1 // pred_check
      _
    $region31: #{tpu_custom_call.1} parent=1 // pred_check_branch
      %363 = sbr.rel (0) target = $region33
    $region32: #{tpu_custom_call.1} parent=1 // pred_region
      %364 = dma.done [#allocation7], 16
    $region33: #{tpu_custom_call.1} parent=1 // pred_fallthru
      _
    %365 = vsyncpa [#allocation3], 1
    %366 = vsyncpa [#allocation4], 1
    %367 = vsyncpa [#allocation7], 1

</llo_original>
